<compile_context>
chip_gen: v7x
topology: tpu7x:2x2x1
jax: 0.10.0
libtpu: 0.0.40
codegen_flags: <defaults>
</compile_context>

<pallas_src>
import functools

import jax
import jax.numpy as jnp
from jax.experimental import pallas as pl
from jax.experimental.pallas import tpu as pltpu


def _vae_kernel(training, compute_dtype, *refs):
    """Whole VAE forward for one batch tile, in [feature, batch] layout."""
    if training:
        (x_ref, eps_ref, w1_ref, w2_ref, w3h_ref,
         wd1_ref, wd2_ref, wd3_ref, b_ref, out_ref) = refs
    else:
        (x_ref, w1_ref, w2_ref, w3h_ref,
         wd1_ref, wd2_ref, wd3_ref, b_ref, out_ref) = refs
        eps_ref = None

    H = w1_ref.shape[0]            # hidden_dim
    L2 = w3h_ref.shape[0]          # 2 * latent_dim (fused mu || log_var head)
    L = L2 // 2

    def dense(w_ref, act, b_off, relu=False):
        width = w_ref.shape[0]
        y = jnp.dot(w_ref[...], act.astype(compute_dtype),
                    preferred_element_type=jnp.float32)
        # packed bias: [width, 1] broadcast across the (batch) lane axis, stays f32
        y = y + b_ref[b_off:b_off + width, :]
        return jnp.maximum(y, 0.0) if relu else y

    # ---- Encoder_VAE ----
    h = dense(w1_ref, x_ref[...], 0, relu=True)
    h = dense(w2_ref, h, H, relu=True)
    hl = dense(w3h_ref, h, 2 * H)              # rows 0:L = mu, rows L:2L = log_var
    mu = hl[:L, :]
    log_var = hl[L:, :]

    # ---- reparameterize ----
    if training:
        z = mu + eps_ref[...].astype(jnp.float32) * jnp.exp(0.5 * log_var)
    else:
        z = mu

    # ---- Decoder ----
    d = dense(wd1_ref, z, 2 * H + L2, relu=True)
    d = dense(wd2_ref, d, 3 * H + L2, relu=True)
    obs_hat = dense(wd3_ref, d, 4 * H + L2)

    # Single lane-dense output slab: rows [0:2L) = (mu || log_var), rows [2L:) = obs_hat.
    # Both stores are sublane-tile aligned (2L = 8) and full lane width (tile_b % 128 == 0).
    out_ref[0:L2, :] = hl.astype(out_ref.dtype)
    out_ref[L2:, :] = obs_hat.astype(out_ref.dtype)


def predict_network_vae_forward(x, eps, packed, *, flag_training,
                                tile_b=None, compute_dtype=jnp.float32):
    """Forward pass of Predict_Network_vae. Returns (obs_next_pre, mu, log_var).

    x:   [B, num_inputs] float32
    eps: [B, latent_dim] float32 (the th.randn_like draw; only used when flag_training)
    packed: output of pack_params() (PyTorch [out, in] weights, fused head, packed biases)
    """
    B, num_inputs = x.shape
    H = packed["w1"].shape[0]
    L2 = packed["w3h"].shape[0]
    L = L2 // 2
    O = packed["wd3"].shape[0]

    # Zero-pad the batch to a multiple of 128 (lane width) so every store is lane-dense.
    B_pad = pl.cdiv(B, 128) * 128
    if tile_b is None:
        tile_b = next(t for t in (512, 256, 128) if B_pad % t == 0)
    assert B_pad % tile_b == 0, "padded batch must be divisible by the batch tile"
    assert tile_b % 128 == 0, "tile_b must be a multiple of 128 (lane-dense stores)"
    grid = (B_pad // tile_b,)

    pad = B_pad - B
    if pad:
        x = jnp.pad(x, ((0, pad), (0, 0)))
        eps = jnp.pad(eps, ((0, pad), (0, 0)))

    # Layout plumbing in the wrapper: batch onto the lane axis.
    xT = x.T.astype(compute_dtype)                     # [num_inputs, B_pad]
    weight_names = ("w1", "w2", "w3h", "wd1", "wd2", "wd3")
    w_args = [packed[k].astype(compute_dtype) for k in weight_names]
    b_pack = packed["b_pack"]                          # [4H + 2L + O, 1] float32

    def act_spec(feat):
        return pl.BlockSpec((feat, tile_b), lambda i: (0, i))

    def const_spec(a):
        zeros = (0,) * a.ndim
        return pl.BlockSpec(a.shape, lambda i: zeros)

    in_specs = [act_spec(num_inputs)]
    args = [xT]
    if flag_training:
        in_specs.append(act_spec(L))
        args.append(eps.T.astype(jnp.float32))         # reparam math stays f32
    in_specs += [const_spec(a) for a in w_args]
    in_specs.append(const_spec(b_pack))
    args += w_args
    args.append(b_pack)

    out_rows = L2 + O
    out_shape = jax.ShapeDtypeStruct((out_rows, B_pad), jnp.float32)
    out_spec = pl.BlockSpec((out_rows, tile_b), lambda i: (0, i))

    kernel = functools.partial(_vae_kernel, bool(flag_training), compute_dtype)

    out = pl.pallas_call(
        kernel,
        out_shape=out_shape,
        grid_spec=pltpu.PrefetchScalarGridSpec(
            num_scalar_prefetch=0,
            grid=grid,
            in_specs=in_specs,
            out_specs=out_spec,
        ),
        compiler_params=pltpu.CompilerParams(
            dimension_semantics=("parallel",)),
    )(*args)

    outT = out.T[:B]                                   # [B, 2L + O]
    mu = outT[:, :L]
    log_var = outT[:, L:L2]
    obs_hat = outT[:, L2:]
    return obs_hat, mu, log_var


def init_params(key, num_inputs, hidden_dim, latent_dim, output_shape):
    """PyTorch nn.Linear-style params: W [out, in], b [out], uniform(+/- 1/sqrt(fan_in))."""
    def linear(k, fan_in, fan_out):
        kw, kb = jax.random.split(k)
        bound = 1.0 / jnp.sqrt(fan_in)
        w = jax.random.uniform(kw, (fan_out, fan_in), jnp.float32, -bound, bound)
        b = jax.random.uniform(kb, (fan_out,), jnp.float32, -bound, bound)
        return w, b

    keys = jax.random.split(key, 7)
    p = {}
    p["w1"], p["b1"] = linear(keys[0], num_inputs, hidden_dim)     # encoder.fc1
    p["w2"], p["b2"] = linear(keys[1], hidden_dim, hidden_dim)     # encoder.fc2
    p["w31"], p["b31"] = linear(keys[2], hidden_dim, latent_dim)   # encoder.fc31 (mu)
    p["w32"], p["b32"] = linear(keys[3], hidden_dim, latent_dim)   # encoder.fc32 (log_var)
    p["wd1"], p["bd1"] = linear(keys[4], latent_dim, hidden_dim)   # decoder.fc1
    p["wd2"], p["bd2"] = linear(keys[5], hidden_dim, hidden_dim)   # decoder.fc2
    p["wd3"], p["bd3"] = linear(keys[6], hidden_dim, output_shape) # decoder.fc3
    return p


def pack_params(p):
    """One-time packing: fuse mu/log_var heads, pack all biases into a single column."""
    w3h = jnp.concatenate([p["w31"], p["w32"]], axis=0)            # [2*latent, hidden]
    b_pack = jnp.concatenate(
        [p["b1"], p["b2"], p["b31"], p["b32"], p["bd1"], p["bd2"], p["bd3"]],
        axis=0)[:, None].astype(jnp.float32)                       # [4H + 2L + O, 1]
    return {"w1": p["w1"], "w2": p["w2"], "w3h": w3h,
            "wd1": p["wd1"], "wd2": p["wd2"], "wd3": p["wd3"],
            "b_pack": b_pack}


def reference_forward(x, eps, p, flag_training):
    """Pure-JAX reference matching the PyTorch module (W stored as [out, in])."""
    relu = lambda v: jnp.maximum(v, 0.0)
    h = relu(x @ p["w1"].T + p["b1"])
    h = relu(h @ p["w2"].T + p["b2"])
    mu = h @ p["w31"].T + p["b31"]
    log_var = h @ p["w32"].T + p["b32"]
    z = mu + eps * jnp.exp(0.5 * log_var) if flag_training else mu
    d = relu(z @ p["wd1"].T + p["bd1"])
    d = relu(d @ p["wd2"].T + p["bd2"])
    obs_hat = d @ p["wd3"].T + p["bd3"]
    return obs_hat, mu, log_var


if __name__ == "__main__":
    B = 256            # flattened bs * seq * n_agents
    num_inputs = 32    # encoder input dim
    hidden_dim = 32
    latent_dim = 4     # fixed in the module
    output_shape = 24
    tile_b = 128       # grid=(2,): lets a v7x chip use both TensorCores; fine on v5e/v6e

    key = jax.random.PRNGKey(0)
    k_params, k_x, k_eps = jax.random.split(key, 3)

    params = init_params(k_params, num_inputs, hidden_dim, latent_dim, output_shape)
    packed = pack_params(params)
    x = jax.random.normal(k_x, (B, num_inputs), jnp.float32)
    # eps is the th.randn_like(std) draw used by reparameterize (training path);
    # it is sampled on the host so the kernel stays deterministic.
    eps = jax.random.normal(k_eps, (B, latent_dim), jnp.float32)

    for flag_training in (True, False):
        ref_obs, ref_mu, ref_lv = reference_forward(x, eps, params, flag_training)

        # f32 path: exact module semantics.
        obs_hat, mu, log_var = predict_network_vae_forward(
            x, eps, packed, flag_training=flag_training,
            tile_b=tile_b, compute_dtype=jnp.float32)
        jax.block_until_ready((obs_hat, mu, log_var))
        assert jnp.allclose(obs_hat, ref_obs, atol=1e-4, rtol=1e-4)
        assert jnp.allclose(mu, ref_mu, atol=1e-4, rtol=1e-4)
        assert jnp.allclose(log_var, ref_lv, atol=1e-4, rtol=1e-4)

        # bf16 matmul-operand path (v6e/v7x MXU-native); epilogue stays f32.
        obs_b, mu_b, lv_b = predict_network_vae_forward(
            x, eps, packed, flag_training=flag_training,
            tile_b=tile_b, compute_dtype=jnp.bfloat16)
        jax.block_until_ready((obs_b, mu_b, lv_b))
        assert jnp.allclose(obs_b, ref_obs, atol=1e-1, rtol=1e-1)
        assert jnp.allclose(mu_b, ref_mu, atol=1e-1, rtol=1e-1)

    # Ragged batch (exercises the zero-pad-to-128 wrapper path), eval mode, f32.
    B2 = 40
    x2 = jax.random.normal(jax.random.PRNGKey(1), (B2, num_inputs), jnp.float32)
    eps2 = jnp.zeros((B2, latent_dim), jnp.float32)
    ref2 = reference_forward(x2, eps2, params, False)
    got2 = predict_network_vae_forward(x2, eps2, packed, flag_training=False,
                                       compute_dtype=jnp.float32)
    jax.block_until_ready(got2)
    for g, r in zip(got2, ref2):
        assert jnp.allclose(g, r, atol=1e-4, rtol=1e-4)

    print("KERNEL_OK")
</pallas_src>

<mosaic_0001>
module attributes {stable_mosaic.version = 11 : i64} {
  func.func @_vae_kernel(%arg0: i32, %arg1: memref<32x128xf32, #tpu.memory_space<vmem>>, %arg2: memref<4x128xf32, #tpu.memory_space<vmem>>, %arg3: memref<32x32xf32, #tpu.memory_space<vmem>>, %arg4: memref<32x32xf32, #tpu.memory_space<vmem>>, %arg5: memref<8x32xf32, #tpu.memory_space<vmem>>, %arg6: memref<32x4xf32, #tpu.memory_space<vmem>>, %arg7: memref<32x32xf32, #tpu.memory_space<vmem>>, %arg8: memref<24x32xf32, #tpu.memory_space<vmem>>, %arg9: memref<160x1xf32, #tpu.memory_space<vmem>>, %arg10: memref<32x128xf32, #tpu.memory_space<vmem>>) attributes {dimension_semantics = [#tpu.dimension_semantics<parallel>], iteration_bounds = array<i64: 2>, scalar_prefetch = 0 : i64, scratch_operands = 0 : i64, tpu.core_type = #tpu.core_type<tc>, window_params = [{transform_indices = @transform_0, window_bounds = array<i64: 32, 128>}, {transform_indices = @transform_1, window_bounds = array<i64: 4, 128>}, {pipeline_mode = #tpu.pipeline_mode<synchronous>, transform_indices = @transform_2, window_bounds = array<i64: 32, 32>}, {pipeline_mode = #tpu.pipeline_mode<synchronous>, transform_indices = @transform_3, window_bounds = array<i64: 32, 32>}, {pipeline_mode = #tpu.pipeline_mode<synchronous>, transform_indices = @transform_4, window_bounds = array<i64: 8, 32>}, {pipeline_mode = #tpu.pipeline_mode<synchronous>, transform_indices = @transform_5, window_bounds = array<i64: 32, 4>}, {pipeline_mode = #tpu.pipeline_mode<synchronous>, transform_indices = @transform_6, window_bounds = array<i64: 32, 32>}, {pipeline_mode = #tpu.pipeline_mode<synchronous>, transform_indices = @transform_7, window_bounds = array<i64: 24, 32>}, {pipeline_mode = #tpu.pipeline_mode<synchronous>, transform_indices = @transform_8, window_bounds = array<i64: 160, 1>}, {transform_indices = @transform_9, window_bounds = array<i64: 32, 128>}]} {
    %c0 = arith.constant 0 : index
    %c0_0 = arith.constant 0 : index
    %0 = vector.load %arg1[%c0, %c0_0] : memref<32x128xf32, #tpu.memory_space<vmem>>, vector<32x128xf32>
    %c0_1 = arith.constant 0 : index
    %c0_2 = arith.constant 0 : index
    %1 = vector.load %arg3[%c0_1, %c0_2] : memref<32x32xf32, #tpu.memory_space<vmem>>, vector<32x32xf32>
    %cst = arith.constant dense<0.000000e+00> : vector<32x128xf32>
    %2 = tpu.matmul %1, %0, %cst {dimension_numbers = #tpu.dot_dimension_numbers<[1], [0], [0], [1], [0, 0, 1, 1], [], []>} : vector<32x32xf32>, vector<32x128xf32>, vector<32x128xf32> -> vector<32x128xf32>
    %c0_3 = arith.constant 0 : index
    %c0_4 = arith.constant 0 : index
    %3 = vector.load %arg9[%c0_3, %c0_4] : memref<160x1xf32, #tpu.memory_space<vmem>>, vector<32x1xf32>
    %4 = vector.broadcast %3 : vector<32x1xf32> to vector<32x128xf32>
    %5 = arith.addf %2, %4 : vector<32x128xf32>
    %cst_5 = arith.constant 0.000000e+00 : f32
    %6 = vector.broadcast %cst_5 : f32 to vector<32x128xf32>
    %7 = arith.maximumf %5, %6 : vector<32x128xf32>
    %c0_6 = arith.constant 0 : index
    %c0_7 = arith.constant 0 : index
    %8 = vector.load %arg4[%c0_6, %c0_7] : memref<32x32xf32, #tpu.memory_space<vmem>>, vector<32x32xf32>
    %cst_8 = arith.constant dense<0.000000e+00> : vector<32x128xf32>
    %9 = tpu.matmul %8, %7, %cst_8 {dimension_numbers = #tpu.dot_dimension_numbers<[1], [0], [0], [1], [0, 0, 1, 1], [], []>} : vector<32x32xf32>, vector<32x128xf32>, vector<32x128xf32> -> vector<32x128xf32>
    %c32 = arith.constant 32 : index
    %c0_9 = arith.constant 0 : index
    %10 = vector.load %arg9[%c32, %c0_9] : memref<160x1xf32, #tpu.memory_space<vmem>>, vector<32x1xf32>
    %11 = vector.broadcast %10 : vector<32x1xf32> to vector<32x128xf32>
    %12 = arith.addf %9, %11 : vector<32x128xf32>
    %cst_10 = arith.constant 0.000000e+00 : f32
    %13 = vector.broadcast %cst_10 : f32 to vector<32x128xf32>
    %14 = arith.maximumf %12, %13 : vector<32x128xf32>
    %c0_11 = arith.constant 0 : index
    %c0_12 = arith.constant 0 : index
    %15 = vector.load %arg5[%c0_11, %c0_12] : memref<8x32xf32, #tpu.memory_space<vmem>>, vector<8x32xf32>
    %cst_13 = arith.constant dense<0.000000e+00> : vector<8x128xf32>
    %16 = tpu.matmul %15, %14, %cst_13 {dimension_numbers = #tpu.dot_dimension_numbers<[1], [0], [0], [1], [0, 0, 1, 1], [], []>} : vector<8x32xf32>, vector<32x128xf32>, vector<8x128xf32> -> vector<8x128xf32>
    %c64 = arith.constant 64 : index
    %c0_14 = arith.constant 0 : index
    %17 = vector.load %arg9[%c64, %c0_14] : memref<160x1xf32, #tpu.memory_space<vmem>>, vector<8x1xf32>
    %18 = vector.broadcast %17 : vector<8x1xf32> to vector<8x128xf32>
    %19 = arith.addf %16, %18 : vector<8x128xf32>
    %20 = vector.extract_strided_slice %19 {offsets = [0, 0], sizes = [4, 128], strides = [1, 1]} : vector<8x128xf32> to vector<4x128xf32>
    %21 = vector.extract_strided_slice %19 {offsets = [4, 0], sizes = [4, 128], strides = [1, 1]} : vector<8x128xf32> to vector<4x128xf32>
    %c0_15 = arith.constant 0 : index
    %c0_16 = arith.constant 0 : index
    %22 = vector.load %arg2[%c0_15, %c0_16] : memref<4x128xf32, #tpu.memory_space<vmem>>, vector<4x128xf32>
    %cst_17 = arith.constant 5.000000e-01 : f32
    %23 = vector.broadcast %cst_17 : f32 to vector<4x128xf32>
    %24 = arith.mulf %23, %21 : vector<4x128xf32>
    %25 = math.exp %24 : vector<4x128xf32>
    %26 = arith.mulf %22, %25 : vector<4x128xf32>
    %27 = arith.addf %20, %26 : vector<4x128xf32>
    %c0_18 = arith.constant 0 : index
    %c0_19 = arith.constant 0 : index
    %28 = vector.load %arg6[%c0_18, %c0_19] : memref<32x4xf32, #tpu.memory_space<vmem>>, vector<32x4xf32>
    %cst_20 = arith.constant dense<0.000000e+00> : vector<32x128xf32>
    %29 = tpu.matmul %28, %27, %cst_20 {dimension_numbers = #tpu.dot_dimension_numbers<[1], [0], [0], [1], [0, 0, 1, 1], [], []>} : vector<32x4xf32>, vector<4x128xf32>, vector<32x128xf32> -> vector<32x128xf32>
    %c72 = arith.constant 72 : index
    %c0_21 = arith.constant 0 : index
    %30 = vector.load %arg9[%c72, %c0_21] : memref<160x1xf32, #tpu.memory_space<vmem>>, vector<32x1xf32>
    %31 = vector.broadcast %30 : vector<32x1xf32> to vector<32x128xf32>
    %32 = arith.addf %29, %31 : vector<32x128xf32>
    %cst_22 = arith.constant 0.000000e+00 : f32
    %33 = vector.broadcast %cst_22 : f32 to vector<32x128xf32>
    %34 = arith.maximumf %32, %33 : vector<32x128xf32>
    %c0_23 = arith.constant 0 : index
    %c0_24 = arith.constant 0 : index
    %35 = vector.load %arg7[%c0_23, %c0_24] : memref<32x32xf32, #tpu.memory_space<vmem>>, vector<32x32xf32>
    %cst_25 = arith.constant dense<0.000000e+00> : vector<32x128xf32>
    %36 = tpu.matmul %35, %34, %cst_25 {dimension_numbers = #tpu.dot_dimension_numbers<[1], [0], [0], [1], [0, 0, 1, 1], [], []>} : vector<32x32xf32>, vector<32x128xf32>, vector<32x128xf32> -> vector<32x128xf32>
    %c104 = arith.constant 104 : index
    %c0_26 = arith.constant 0 : index
    %37 = vector.load %arg9[%c104, %c0_26] : memref<160x1xf32, #tpu.memory_space<vmem>>, vector<32x1xf32>
    %38 = vector.broadcast %37 : vector<32x1xf32> to vector<32x128xf32>
    %39 = arith.addf %36, %38 : vector<32x128xf32>
    %cst_27 = arith.constant 0.000000e+00 : f32
    %40 = vector.broadcast %cst_27 : f32 to vector<32x128xf32>
    %41 = arith.maximumf %39, %40 : vector<32x128xf32>
    %c0_28 = arith.constant 0 : index
    %c0_29 = arith.constant 0 : index
    %42 = vector.load %arg8[%c0_28, %c0_29] : memref<24x32xf32, #tpu.memory_space<vmem>>, vector<24x32xf32>
    %cst_30 = arith.constant dense<0.000000e+00> : vector<24x128xf32>
    %43 = tpu.matmul %42, %41, %cst_30 {dimension_numbers = #tpu.dot_dimension_numbers<[1], [0], [0], [1], [0, 0, 1, 1], [], []>} : vector<24x32xf32>, vector<32x128xf32>, vector<24x128xf32> -> vector<24x128xf32>
    %c136 = arith.constant 136 : index
    %c0_31 = arith.constant 0 : index
    %44 = vector.load %arg9[%c136, %c0_31] : memref<160x1xf32, #tpu.memory_space<vmem>>, vector<24x1xf32>
    %45 = vector.broadcast %44 : vector<24x1xf32> to vector<24x128xf32>
    %46 = arith.addf %43, %45 : vector<24x128xf32>
    %c0_32 = arith.constant 0 : index
    %c0_33 = arith.constant 0 : index
    %47 = vector.load %arg10[%c0_32, %c0_33] : memref<32x128xf32, #tpu.memory_space<vmem>>, vector<8x128xf32>
    tpu.vector_store %arg10[%c0_32, %c0_33], %19 {strides = array<i32>} : memref<32x128xf32, #tpu.memory_space<vmem>>, vector<8x128xf32>,
    %c8 = arith.constant 8 : index
    %c0_34 = arith.constant 0 : index
    %48 = vector.load %arg10[%c8, %c0_34] : memref<32x128xf32, #tpu.memory_space<vmem>>, vector<24x128xf32>
    tpu.vector_store %arg10[%c8, %c0_34], %46 {strides = array<i32>} : memref<32x128xf32, #tpu.memory_space<vmem>>, vector<24x128xf32>,
    return
  }
  func.func @transform_0(%arg0: i32) -> (i32, i32) {
    %c0_i32 = arith.constant 0 : i32
    %c0_i32_0 = arith.constant 0 : i32
    return %c0_i32, %arg0 : i32, i32
  }
  func.func @transform_1(%arg0: i32) -> (i32, i32) {
    %c0_i32 = arith.constant 0 : i32
    %c0_i32_0 = arith.constant 0 : i32
    return %c0_i32, %arg0 : i32, i32
  }
  func.func @transform_2(%arg0: i32) -> (i32, i32) {
    %c0_i32 = arith.constant 0 : i32
    %c0_i32_0 = arith.constant 0 : i32
    %c0_i32_1 = arith.constant 0 : i32
    return %c0_i32, %c0_i32_0 : i32, i32
  }
  func.func @transform_3(%arg0: i32) -> (i32, i32) {
    %c0_i32 = arith.constant 0 : i32
    %c0_i32_0 = arith.constant 0 : i32
    %c0_i32_1 = arith.constant 0 : i32
    return %c0_i32, %c0_i32_0 : i32, i32
  }
  func.func @transform_4(%arg0: i32) -> (i32, i32) {
    %c0_i32 = arith.constant 0 : i32
    %c0_i32_0 = arith.constant 0 : i32
    %c0_i32_1 = arith.constant 0 : i32
    return %c0_i32, %c0_i32_0 : i32, i32
  }
  func.func @transform_5(%arg0: i32) -> (i32, i32) {
    %c0_i32 = arith.constant 0 : i32
    %c0_i32_0 = arith.constant 0 : i32
    %c0_i32_1 = arith.constant 0 : i32
    return %c0_i32, %c0_i32_0 : i32, i32
  }
  func.func @transform_6(%arg0: i32) -> (i32, i32) {
    %c0_i32 = arith.constant 0 : i32
    %c0_i32_0 = arith.constant 0 : i32
    %c0_i32_1 = arith.constant 0 : i32
    return %c0_i32, %c0_i32_0 : i32, i32
  }
  func.func @transform_7(%arg0: i32) -> (i32, i32) {
    %c0_i32 = arith.constant 0 : i32
    %c0_i32_0 = arith.constant 0 : i32
    %c0_i32_1 = arith.constant 0 : i32
    return %c0_i32, %c0_i32_0 : i32, i32
  }
  func.func @transform_8(%arg0: i32) -> (i32, i32) {
    %c0_i32 = arith.constant 0 : i32
    %c0_i32_0 = arith.constant 0 : i32
    %c0_i32_1 = arith.constant 0 : i32
    return %c0_i32, %c0_i32_0 : i32, i32
  }
  func.func @transform_9(%arg0: i32) -> (i32, i32) {
    %c0_i32 = arith.constant 0 : i32
    %c0_i32_0 = arith.constant 0 : i32
    return %c0_i32, %arg0 : i32, i32
  }
}

</mosaic_0001>

<llo_original>
// kernel: tpu_custom_call.1
$region0: #{tpu_custom_call.1}
  #allocation0 [shape = 'u32[]', space=smem, size = 0x4, offset = 0x4, fixed_abs, tag = 'smem constant byte address 0x4 - core index']
  #allocation1 [shape = 'u32[144,128]{1,0:T(1,128)}', space=vmem, size = 0x12000, scoped, tag = 'internal scratch']
  %s0 = inlined_call_operand.vmem [shape: f32[32,256], index: 0, kind: input, shape index: {}]
  %s1 = inlined_call_operand.vmem [shape: f32[4,256], index: 1, kind: input, shape index: {}]
  %s2 = inlined_call_operand.vmem [shape: f32[32,32], index: 2, kind: input, shape index: {}]
  %s3 = inlined_call_operand.vmem [shape: f32[32,32], index: 3, kind: input, shape index: {}]
  %s4 = inlined_call_operand.vmem [shape: f32[8,32], index: 4, kind: input, shape index: {}]
  %s5 = inlined_call_operand.vmem [shape: f32[32,4], index: 5, kind: input, shape index: {}]
  %s6 = inlined_call_operand.vmem [shape: f32[32,32], index: 6, kind: input, shape index: {}]
  %s7 = inlined_call_operand.vmem [shape: f32[24,32], index: 7, kind: input, shape index: {}]
  %s8 = inlined_call_operand.vmem [shape: f32[160,1], index: 8, kind: input, shape index: {}]
  %s9 = inlined_call_operand.hbm [shape: f32[32,256], index: 9, kind: output, shape index: {}]
  %s10 = sld [smem:[#allocation0]]
  $region107: #{tpu_custom_call.1} parent=0
    _
  %s12 = ssub.s32 1, %s10
  %s13 = scalar_select 0, %s12, %s10
  $region1: #{tpu_custom_call.1} parent=0
    #allocation2 [shape = 'u8[32768]{0}', space=vmem, size = 0x8000, scoped, tag = 'input window, operand 0']
    #allocation3 [shape = 'u8[32768]{0}', space=vmem, size = 0x8000, scoped, tag = 'output window, operand 0']
    #allocation4 [shape = 's32[2]{0}', space=sflag, size = 0x8, scoped, tag = 'scoped memory for tpu_custom_call.1']
    %14 = vsyncpa [#allocation4], 0
    %s15 = scalar_lea.sflag [#allocation4], 1
    %16 = vsyncpa %s15, 0
    loop: start=0, step=1, limit=4
    $region2: #{tpu_custom_call.1} parent=1 // loop_pre_header
      _
    $region3: #{tpu_custom_call.1} parent=1 // loop_header
      %s18 = sphi 0, %s22
      %p19 = scmp.ge.s32.totalorder %s18, 4
      %s28 = sphi 0, %s30
      %s31 = sphi 0, %s28
      %s32 = sphi 0, %s31
      %s48 = sphi 0, %s32
      %s54 = sphi 0, %s56
      %s57 = sphi 0, %s54
      %s58 = sphi 0, %s57
      %s74 = sphi 0, %s58
      %s78 = sphi 0, %s78
      %s80 = sphi 0, %s78
      %s81 = sphi 0, %s80
      %s95 = sphi 0, %s81
      %s99 = sphi 0, %s99
      %s101 = sphi 0, %s99
      %s102 = sphi 0, %s101
      %s116 = sphi 0, %s102
      %s120 = sphi 0, %s120
      %s122 = sphi 0, %s120
      %s123 = sphi 0, %s122
      %s137 = sphi 0, %s123
      %s141 = sphi 0, %s141
      %s143 = sphi 0, %s141
      %s144 = sphi 0, %s143
      %s158 = sphi 0, %s144
      %s162 = sphi 0, %s162
      %s164 = sphi 0, %s162
      %s165 = sphi 0, %s164
      %s179 = sphi 0, %s165
      %s183 = sphi 0, %s183
      %s185 = sphi 0, %s183
      %s186 = sphi 0, %s185
      %s200 = sphi 0, %s186
      %s204 = sphi 0, %s204
      %s206 = sphi 0, %s204
      %s207 = sphi 0, %s206
      %s221 = sphi 0, %s207
      %s227 = sphi 0, %s229
      %s230 = sphi 0, %s227
      %s231 = sphi 0, %s230
      %s247 = sphi 0, %s231
    $region4: #{tpu_custom_call.1} parent=1 // loop_header_branch
      %21 = sbr.rel (%p19) target = $region8
    $region5: #{tpu_custom_call.1} parent=1 // loop_body
      %s23 = ssub.s32 %s18, 1
      %s24 = ssub.s32 %s18, 2
      %s25 = sadd.s32 %s18, 1
      %s26 = ssub.s32 %s18, %s25
      %p27 = scmp.eq.s32.totalorder %s26, 0
      %s29 = sadd.s32 %s28, 1
      %s30 = scalar_select %p27, %s28, %s29
      %p33 = pneg %p27
      %p34 = scmp.eq.s32.totalorder %s18, 1
      %p35 = por %p33, %p34
      %p36 = scmp.ne.s32.totalorder %s28, %s31
      %p37 = scmp.eq.s32.totalorder %s18, 0
      %p38 = por %p36, %p37
      %p39 = scmp.ne.s32.totalorder %s28, %s31
      %p40 = scmp.eq.s32.totalorder %s23, 1
      %p41 = por %p39, %p40
      %p42 = scmp.ne.s32.totalorder %s31, %s32
      %p43 = scmp.eq.s32.totalorder %s23, 0
      %p44 = por %p42, %p43
      %p45 = scmp.ne.s32.totalorder %s31, %s32
      %p46 = scmp.eq.s32.totalorder %s24, 1
      %p47 = por %p45, %p46
      %p49 = scmp.ne.s32.totalorder %s32, %s48
      %p50 = scmp.eq.s32.totalorder %s24, 0
      %p51 = por %p49, %p50
      %s52 = ssub.s32 %s18, %s25
      %p53 = scmp.eq.s32.totalorder %s52, 0
      %s55 = sadd.s32 %s54, 1
      %s56 = scalar_select %p53, %s54, %s55
      %p59 = pneg %p53
      %p60 = scmp.eq.s32.totalorder %s18, 1
      %p61 = por %p59, %p60
      %p62 = scmp.ne.s32.totalorder %s54, %s57
      %p63 = scmp.eq.s32.totalorder %s18, 0
      %p64 = por %p62, %p63
      %p65 = scmp.ne.s32.totalorder %s54, %s57
      %p66 = scmp.eq.s32.totalorder %s23, 1
      %p67 = por %p65, %p66
      %p68 = scmp.ne.s32.totalorder %s57, %s58
      %p69 = scmp.eq.s32.totalorder %s23, 0
      %p70 = por %p68, %p69
      %p71 = scmp.ne.s32.totalorder %s57, %s58
      %p72 = scmp.eq.s32.totalorder %s24, 1
      %p73 = por %p71, %p72
      %p75 = scmp.ne.s32.totalorder %s58, %s74
      %p76 = scmp.eq.s32.totalorder %s24, 0
      %p77 = por %p75, %p76
      %s79 = sadd.s32 %s78, 1
      %p82 = scmp.eq.s32.totalorder %s18, 1
      %p83 = scmp.ne.s32.totalorder %s78, %s80
      %p84 = scmp.eq.s32.totalorder %s18, 0
      %p85 = por %p83, %p84
      %p86 = scmp.ne.s32.totalorder %s78, %s80
      %p87 = scmp.eq.s32.totalorder %s23, 1
      %p88 = por %p86, %p87
      %p89 = scmp.ne.s32.totalorder %s80, %s81
      %p90 = scmp.eq.s32.totalorder %s23, 0
      %p91 = por %p89, %p90
      %p92 = scmp.ne.s32.totalorder %s80, %s81
      %p93 = scmp.eq.s32.totalorder %s24, 1
      %p94 = por %p92, %p93
      %p96 = scmp.ne.s32.totalorder %s81, %s95
      %p97 = scmp.eq.s32.totalorder %s24, 0
      %p98 = por %p96, %p97
      %s100 = sadd.s32 %s99, 1
      %p103 = scmp.eq.s32.totalorder %s18, 1
      %p104 = scmp.ne.s32.totalorder %s99, %s101
      %p105 = scmp.eq.s32.totalorder %s18, 0
      %p106 = por %p104, %p105
      %p107 = scmp.ne.s32.totalorder %s99, %s101
      %p108 = scmp.eq.s32.totalorder %s23, 1
      %p109 = por %p107, %p108
      %p110 = scmp.ne.s32.totalorder %s101, %s102
      %p111 = scmp.eq.s32.totalorder %s23, 0
      %p112 = por %p110, %p111
      %p113 = scmp.ne.s32.totalorder %s101, %s102
      %p114 = scmp.eq.s32.totalorder %s24, 1
      %p115 = por %p113, %p114
      %p117 = scmp.ne.s32.totalorder %s102, %s116
      %p118 = scmp.eq.s32.totalorder %s24, 0
      %p119 = por %p117, %p118
      %s121 = sadd.s32 %s120, 1
      %p124 = scmp.eq.s32.totalorder %s18, 1
      %p125 = scmp.ne.s32.totalorder %s120, %s122
      %p126 = scmp.eq.s32.totalorder %s18, 0
      %p127 = por %p125, %p126
      %p128 = scmp.ne.s32.totalorder %s120, %s122
      %p129 = scmp.eq.s32.totalorder %s23, 1
      %p130 = por %p128, %p129
      %p131 = scmp.ne.s32.totalorder %s122, %s123
      %p132 = scmp.eq.s32.totalorder %s23, 0
      %p133 = por %p131, %p132
      %p134 = scmp.ne.s32.totalorder %s122, %s123
      %p135 = scmp.eq.s32.totalorder %s24, 1
      %p136 = por %p134, %p135
      %p138 = scmp.ne.s32.totalorder %s123, %s137
      %p139 = scmp.eq.s32.totalorder %s24, 0
      %p140 = por %p138, %p139
      %s142 = sadd.s32 %s141, 1
      %p145 = scmp.eq.s32.totalorder %s18, 1
      %p146 = scmp.ne.s32.totalorder %s141, %s143
      %p147 = scmp.eq.s32.totalorder %s18, 0
      %p148 = por %p146, %p147
      %p149 = scmp.ne.s32.totalorder %s141, %s143
      %p150 = scmp.eq.s32.totalorder %s23, 1
      %p151 = por %p149, %p150
      %p152 = scmp.ne.s32.totalorder %s143, %s144
      %p153 = scmp.eq.s32.totalorder %s23, 0
      %p154 = por %p152, %p153
      %p155 = scmp.ne.s32.totalorder %s143, %s144
      %p156 = scmp.eq.s32.totalorder %s24, 1
      %p157 = por %p155, %p156
      %p159 = scmp.ne.s32.totalorder %s144, %s158
      %p160 = scmp.eq.s32.totalorder %s24, 0
      %p161 = por %p159, %p160
      %s163 = sadd.s32 %s162, 1
      %p166 = scmp.eq.s32.totalorder %s18, 1
      %p167 = scmp.ne.s32.totalorder %s162, %s164
      %p168 = scmp.eq.s32.totalorder %s18, 0
      %p169 = por %p167, %p168
      %p170 = scmp.ne.s32.totalorder %s162, %s164
      %p171 = scmp.eq.s32.totalorder %s23, 1
      %p172 = por %p170, %p171
      %p173 = scmp.ne.s32.totalorder %s164, %s165
      %p174 = scmp.eq.s32.totalorder %s23, 0
      %p175 = por %p173, %p174
      %p176 = scmp.ne.s32.totalorder %s164, %s165
      %p177 = scmp.eq.s32.totalorder %s24, 1
      %p178 = por %p176, %p177
      %p180 = scmp.ne.s32.totalorder %s165, %s179
      %p181 = scmp.eq.s32.totalorder %s24, 0
      %p182 = por %p180, %p181
      %s184 = sadd.s32 %s183, 1
      %p187 = scmp.eq.s32.totalorder %s18, 1
      %p188 = scmp.ne.s32.totalorder %s183, %s185
      %p189 = scmp.eq.s32.totalorder %s18, 0
      %p190 = por %p188, %p189
      %p191 = scmp.ne.s32.totalorder %s183, %s185
      %p192 = scmp.eq.s32.totalorder %s23, 1
      %p193 = por %p191, %p192
      %p194 = scmp.ne.s32.totalorder %s185, %s186
      %p195 = scmp.eq.s32.totalorder %s23, 0
      %p196 = por %p194, %p195
      %p197 = scmp.ne.s32.totalorder %s185, %s186
      %p198 = scmp.eq.s32.totalorder %s24, 1
      %p199 = por %p197, %p198
      %p201 = scmp.ne.s32.totalorder %s186, %s200
      %p202 = scmp.eq.s32.totalorder %s24, 0
      %p203 = por %p201, %p202
      %s205 = sadd.s32 %s204, 1
      %p208 = scmp.eq.s32.totalorder %s18, 1
      %p209 = scmp.ne.s32.totalorder %s204, %s206
      %p210 = scmp.eq.s32.totalorder %s18, 0
      %p211 = por %p209, %p210
      %p212 = scmp.ne.s32.totalorder %s204, %s206
      %p213 = scmp.eq.s32.totalorder %s23, 1
      %p214 = por %p212, %p213
      %p215 = scmp.ne.s32.totalorder %s206, %s207
      %p216 = scmp.eq.s32.totalorder %s23, 0
      %p217 = por %p215, %p216
      %p218 = scmp.ne.s32.totalorder %s206, %s207
      %p219 = scmp.eq.s32.totalorder %s24, 1
      %p220 = por %p218, %p219
      %p222 = scmp.ne.s32.totalorder %s207, %s221
      %p223 = scmp.eq.s32.totalorder %s24, 0
      %p224 = por %p222, %p223
      %s225 = ssub.s32 %s18, %s25
      %p226 = scmp.eq.s32.totalorder %s225, 0
      %s228 = sadd.s32 %s227, 1
      %s229 = scalar_select %p226, %s227, %s228
      %p232 = pneg %p226
      %p233 = scmp.eq.s32.totalorder %s18, 1
      %p234 = por %p232, %p233
      %p235 = scmp.ne.s32.totalorder %s227, %s230
      %p236 = scmp.eq.s32.totalorder %s18, 0
      %p237 = por %p235, %p236
      %p238 = scmp.ne.s32.totalorder %s227, %s230
      %p239 = scmp.eq.s32.totalorder %s23, 1
      %p240 = por %p238, %p239
      %p241 = scmp.ne.s32.totalorder %s230, %s231
      %p242 = scmp.eq.s32.totalorder %s23, 0
      %p243 = por %p241, %p242
      %p244 = scmp.ne.s32.totalorder %s230, %s231
      %p245 = scmp.eq.s32.totalorder %s24, 1
      %p246 = por %p244, %p245
      %p248 = scmp.ne.s32.totalorder %s231, %s247
      %p249 = scmp.eq.s32.totalorder %s24, 0
      %p250 = por %p248, %p249
      %p251 = scmp.le.s32.totalorder 1, %s18
      %p252 = scmp.lt.s32.totalorder %s18, 3
      %p253 = pnand %p251, %p252
      %p254 = pneg %p253
      // Predicated region
      $region9: #{tpu_custom_call.1} parent=5 // pred_check
        _
      $region10: #{tpu_custom_call.1} parent=5 // pred_check_branch
        %256 = sbr.rel (%p253) target = $region12
      $region11: #{tpu_custom_call.1} parent=5 // pred_region
        %s257 = ssub.s32 %s18, 1
        // Predicated region
        $region13: #{tpu_custom_call.1} parent=11 // pred_check
          %p258 = pneg %p91
        $region14: #{tpu_custom_call.1} parent=11 // pred_check_branch
          %260 = sbr.rel (%p258) target = $region16
        $region15: #{tpu_custom_call.1} parent=11 // pred_region
          _
        $region16: #{tpu_custom_call.1} parent=11 // pred_fallthru
          _
        // Predicated region
        $region17: #{tpu_custom_call.1} parent=11 // pred_check
          %p261 = pneg %p112
        $region18: #{tpu_custom_call.1} parent=11 // pred_check_branch
          %263 = sbr.rel (%p261) target = $region20
        $region19: #{tpu_custom_call.1} parent=11 // pred_region
          _
        $region20: #{tpu_custom_call.1} parent=11 // pred_fallthru
          _
        // Predicated region
        $region21: #{tpu_custom_call.1} parent=11 // pred_check
          %p264 = pneg %p133
        $region22: #{tpu_custom_call.1} parent=11 // pred_check_branch
          %266 = sbr.rel (%p264) target = $region24
        $region23: #{tpu_custom_call.1} parent=11 // pred_region
          _
        $region24: #{tpu_custom_call.1} parent=11 // pred_fallthru
          _
        // Predicated region
        $region25: #{tpu_custom_call.1} parent=11 // pred_check
          %p267 = pneg %p154
        $region26: #{tpu_custom_call.1} parent=11 // pred_check_branch
          %269 = sbr.rel (%p267) target = $region28
        $region27: #{tpu_custom_call.1} parent=11 // pred_region
          _
        $region28: #{tpu_custom_call.1} parent=11 // pred_fallthru
          _
        // Predicated region
        $region29: #{tpu_custom_call.1} parent=11 // pred_check
          %p270 = pneg %p175
        $region30: #{tpu_custom_call.1} parent=11 // pred_check_branch
          %272 = sbr.rel (%p270) target = $region32
        $region31: #{tpu_custom_call.1} parent=11 // pred_region
          _
        $region32: #{tpu_custom_call.1} parent=11 // pred_fallthru
          _
        // Predicated region
        $region33: #{tpu_custom_call.1} parent=11 // pred_check
          %p273 = pneg %p196
        $region34: #{tpu_custom_call.1} parent=11 // pred_check_branch
          %275 = sbr.rel (%p273) target = $region36
        $region35: #{tpu_custom_call.1} parent=11 // pred_region
          _
        $region36: #{tpu_custom_call.1} parent=11 // pred_fallthru
          _
        // Predicated region
        $region37: #{tpu_custom_call.1} parent=11 // pred_check
          %p276 = pneg %p217
        $region38: #{tpu_custom_call.1} parent=11 // pred_check_branch
          %278 = sbr.rel (%p276) target = $region40
        $region39: #{tpu_custom_call.1} parent=11 // pred_region
          _
        $region40: #{tpu_custom_call.1} parent=11 // pred_fallthru
          _
      $region12: #{tpu_custom_call.1} parent=5 // pred_fallthru
        _
      %p279 = scmp.lt.s32.totalorder %s18, 2
      // Predicated region
      $region41: #{tpu_custom_call.1} parent=5 // pred_check
        %p280 = pneg %p279
      $region42: #{tpu_custom_call.1} parent=5 // pred_check_branch
        %282 = sbr.rel (%p280) target = $region44
      $region43: #{tpu_custom_call.1} parent=5 // pred_region
        // Predicated region
        $region45: #{tpu_custom_call.1} parent=43 // pred_check
          %p283 = pneg %p38
        $region46: #{tpu_custom_call.1} parent=43 // pred_check_branch
          %285 = sbr.rel (%p283) target = $region48
        $region47: #{tpu_custom_call.1} parent=43 // pred_region
          %s286 = sand.u32 %s28, 1
          %s287 = sand.u32 %s28, 1
          %s288 = smul.addr %s287, 32
          %s289 = scalar_lea.vmem [#allocation2], %s288
          %s290 = smul.addr %s18, 8
          %s291 = scalar_lea.vmem %s0, %s290
          // Predicated region
          $region49: #{tpu_custom_call.1} parent=47 // pred_check
            _
          $region50: #{tpu_custom_call.1} parent=47 // pred_check_branch
            %293 = sbr.rel (0) target = $region52
          $region51: #{tpu_custom_call.1} parent=47 // pred_region
            // Predicated region
            $region53: #{tpu_custom_call.1} parent=51 // pred_check
              _
            $region54: #{tpu_custom_call.1} parent=51 // pred_check_branch
              %295 = sbr.rel (0) target = $region56
            $region55: #{tpu_custom_call.1} parent=51 // pred_region
              // Predicated region
              $region68: #{tpu_custom_call.1} parent=55 // pred_check
                _
              $region69: #{tpu_custom_call.1} parent=55 // pred_check_branch
                %316 = sbr.rel (0) target = $region71
              $region70: #{tpu_custom_call.1} parent=55 // pred_region
                loop: start=0, step=1, limit=1
                $region72: #{tpu_custom_call.1} parent=70 // loop_pre_header
                  _
                $region73: #{tpu_custom_call.1} parent=70 // loop_header
                  %s318 = sphi 0, %s322
                  %p319 = scmp.ge.s32.totalorder %s318, 1
                  %s323 = sphi %s291, %s291
                  %s324 = sphi %s289, %s289
                $region74: #{tpu_custom_call.1} parent=70 // loop_header_branch
                  %321 = sbr.rel (%p319) target = $region78
                $region75: #{tpu_custom_call.1} parent=70 // loop_body
                  %v325 = vld [vmem:[%s323] sm:$0xff]
                  %326 = vst [vmem:[%s324] sm:$0xff] %v325
                  %v327 = vld [vmem:[%s323 + $0x10] sm:$0xff]
                  %328 = vst [vmem:[%s324 + $0x8] sm:$0xff] %v327
                  %v329 = vld [vmem:[%s323 + $0x20] sm:$0xff]
                  %330 = vst [vmem:[%s324 + $0x10] sm:$0xff] %v329
                  %v331 = vld [vmem:[%s323 + $0x30] sm:$0xff]
                  %332 = vst [vmem:[%s324 + $0x18] sm:$0xff] %v331
                $region76: #{tpu_custom_call.1} parent=70 // loop_footer
                  %s322 = sadd.s32 1, %s318
                $region77: #{tpu_custom_call.1} parent=70 // loop_footer_branch
                  %317 = sbr.rel target = $region73
                $region78: #{tpu_custom_call.1} parent=70 // loop_exit
                  _
              $region71: #{tpu_custom_call.1} parent=55 // pred_fallthru
                _
              // Predicated region
              $region79: #{tpu_custom_call.1} parent=55 // pred_check
                _
              $region80: #{tpu_custom_call.1} parent=55 // pred_check_branch
                %334 = sbr.rel target = $region82
              $region81: #{tpu_custom_call.1} parent=55 // pred_region
                _
              $region82: #{tpu_custom_call.1} parent=55 // pred_fallthru
                _
            $region56: #{tpu_custom_call.1} parent=51 // pred_fallthru
              _
            // Predicated region
            $region57: #{tpu_custom_call.1} parent=51 // pred_check
              _
            $region58: #{tpu_custom_call.1} parent=51 // pred_check_branch
              %297 = sbr.rel target = $region60
            $region59: #{tpu_custom_call.1} parent=51 // pred_region
              loop: start=0, step=1, limit=1
              $region61: #{tpu_custom_call.1} parent=59 // loop_pre_header
                _
              $region62: #{tpu_custom_call.1} parent=59 // loop_header
                %s300 = sphi 0, %s304
                %p301 = scmp.ge.s32.totalorder %s300, 1
                %s305 = sphi %s291, %s291
                %s306 = sphi %s289, %s289
              $region63: #{tpu_custom_call.1} parent=59 // loop_header_branch
                %303 = sbr.rel (%p301) target = $region67
              $region64: #{tpu_custom_call.1} parent=59 // loop_body
                %v307 = vld [vmem:[%s305] sm:$0xff]
                %308 = vst [vmem:[%s306] sm:$0xff] %v307
                %v309 = vld [vmem:[%s305 + $0x10] sm:$0xff]
                %310 = vst [vmem:[%s306 + $0x8] sm:$0xff] %v309
                %v311 = vld [vmem:[%s305 + $0x20] sm:$0xff]
                %312 = vst [vmem:[%s306 + $0x10] sm:$0xff] %v311
                %v313 = vld [vmem:[%s305 + $0x30] sm:$0xff]
                %314 = vst [vmem:[%s306 + $0x18] sm:$0xff] %v313
              $region65: #{tpu_custom_call.1} parent=59 // loop_footer
                %s304 = sadd.s32 1, %s300
              $region66: #{tpu_custom_call.1} parent=59 // loop_footer_branch
                %299 = sbr.rel target = $region62
              $region67: #{tpu_custom_call.1} parent=59 // loop_exit
                _
            $region60: #{tpu_custom_call.1} parent=51 // pred_fallthru
              _
          $region52: #{tpu_custom_call.1} parent=47 // pred_fallthru
            _
          %335 = vnop
        $region48: #{tpu_custom_call.1} parent=43 // pred_fallthru
          _
        // Predicated region
        $region83: #{tpu_custom_call.1} parent=43 // pred_check
          %p336 = pneg %p64
        $region84: #{tpu_custom_call.1} parent=43 // pred_check_branch
          %338 = sbr.rel (%p336) target = $region86
        $region85: #{tpu_custom_call.1} parent=43 // pred_region
          %p339 = scmp.lt.s32.totalorder %s18, 1
          %s340 = scalar_select %p339, %s18, 1
          %s341 = smul.addr %s340, 4
          %s342 = scalar_lea.vmem %s1, %s341
        $region86: #{tpu_custom_call.1} parent=43 // pred_fallthru
          _
      $region44: #{tpu_custom_call.1} parent=5 // pred_fallthru
        _
      %p343 = scmp.le.s32.totalorder 1, %s18
      %p344 = scmp.lt.s32.totalorder %s18, 3
      %p345 = pnand %p343, %p344
      %p346 = pneg %p345
      // Predicated region
      $region87: #{tpu_custom_call.1} parent=5 // pred_check
        _
      $region88: #{tpu_custom_call.1} parent=5 // pred_check_branch
        %348 = sbr.rel (%p345) target = $region90
      $region89: #{tpu_custom_call.1} parent=5 // pred_region
        %s349 = ssub.s32 %s18, 1
        %s350 = sand.u32 %s31, 1
        %s351 = sand.u32 %s31, 1
        %s352 = smul.addr %s351, 32
        %s353 = scalar_lea.vmem [#allocation2], %s352
        // Predicated region
        $region91: #{tpu_custom_call.1} parent=89 // pred_check
          %p354 = pneg %p44
        $region92: #{tpu_custom_call.1} parent=89 // pred_check_branch
          %356 = sbr.rel (%p354) target = $region94
        $region93: #{tpu_custom_call.1} parent=89 // pred_region
          _
        $region94: #{tpu_custom_call.1} parent=89 // pred_fallthru
          _
        %s357 = sand.u32 %s31, 1
        %s358 = sand.u32 %s31, 1
        %s359 = smul.addr %s358, 32
        %s360 = scalar_lea.vmem [#allocation2], %s359
        %p361 = pneg %p44
        %p362 = pneg %p41
        %p363 = scmp.lt.s32.totalorder %s23, 1
        %s364 = scalar_select %p363, %s23, 1
        %s365 = smul.addr %s364, 4
        %s366 = scalar_lea.vmem %s1, %s365
        %p367 = pneg %p70
        %p368 = pneg %p67
        %p369 = pneg %p91
        %p370 = pneg %p88
        %p371 = pneg %p112
        %p372 = pneg %p109
        %p373 = pneg %p133
        %p374 = pneg %p130
        %p375 = pneg %p154
        %p376 = pneg %p151
        %p377 = pneg %p175
        %p378 = pneg %p172
        %p379 = pneg %p196
        %p380 = pneg %p193
        %p381 = pneg %p217
        %p382 = pneg %p214
        %p383 = pneg %p243
        %p384 = pneg %p240
        %s385 = sand.u32 %s230, 1
        %s386 = scalar_lea.sflag [#allocation4], %s385
        %s387 = sand.u32 %s230, 1
        %s388 = smul.addr %s387, 32
        %s389 = scalar_lea.vmem [#allocation3], %s388
        %p390 = scmp.lt.s32.totalorder %s23, 1
        %s391 = scalar_select %p390, %s23, 1
        %s392 = smul.addr %s391, 4
        %s393 = scalar_lea.vmem %s1, %s392
        %v394 = vld [vmem:[%s353] sm:$0xff]
        %v395 = vld [vmem:[%s353 + $0x8] sm:$0xff]
        %v396 = vld [vmem:[%s353 + $0x10] sm:$0xff]
        %v397 = vld [vmem:[%s353 + $0x18] sm:$0xff]
        %v398 = vld [vmem:[%s2] sm:$0xff]
        %v399 = vld [vmem:[%s2 + $0x8] sm:$0xff]
        %v400 = vld [vmem:[%s2 + $0x10] sm:$0xff]
        %v401 = vld [vmem:[%s2 + $0x18] sm:$0xff]
        %v402 = vld [vmem:[%s8] sm:$0xff]
        %v403 = vld [vmem:[%s8 + $0x8] sm:$0xff]
        %v404 = vld [vmem:[%s8 + $0x10] sm:$0xff]
        %v405 = vld [vmem:[%s8 + $0x18] sm:$0xff]
        %407 = vset.pattern.permute.xlu0 0
        %408 = vperm.xlu0 %407, %v402
        %v409 = vpop.permute.xlu0 %408
        %412 = vset.pattern.permute.xlu0 0
        %413 = vperm.xlu0 %412, %v403
        %v414 = vpop.permute.xlu0 %413
        %417 = vset.pattern.permute.xlu0 0
        %418 = vperm.xlu0 %417, %v404
        %v419 = vpop.permute.xlu0 %418
        %422 = vset.pattern.permute.xlu0 0
        %423 = vperm.xlu0 %422, %v405
        %v424 = vpop.permute.xlu0 %423
        %vm426 = vcmask 261120
        %v428 = vsel %vm426, %v398, 0
        %v431 = vsel %vm426, %v399, 0
        %v434 = vsel %vm426, %v400, 0
        %v437 = vsel %vm426, %v401, 0
        %439 = vmatprep.subr.mxu0 0.0
        %440 = vmatpush1.msra.mxu0 %v394
        %441 = vmatprep.subr.mxu0 0.0
        %442 = vmatpush1.msra.mxu0 %v395
        %443 = vmatprep.subr.mxu0 0.0
        %444 = vmatpush1.msra.mxu0 %v396
        %445 = vmatprep.subr.mxu0 0.0
        %446 = vmatpush1.msra.mxu0 %v397
        %447 = vmatprep.subr.mxu0 0.0
        %448 = vmatpush1.msra.mxu0 0.0
        %449 = vmatprep.subr.mxu0 0.0
        %450 = vmatpush1.msra.mxu0 0.0
        %451 = vmatprep.subr.mxu0 0.0
        %452 = vmatpush1.msra.mxu0 0.0
        %453 = vmatprep.subr.mxu0 0.0
        %454 = vmatpush1.msra.mxu0 0.0
        %455 = vmatprep.subr.mxu0 0.0
        %456 = vmatpush1.msra.mxu0 0.0
        %457 = vmatprep.subr.mxu0 0.0
        %458 = vmatpush1.msra.mxu0 0.0
        %459 = vmatprep.subr.mxu0 0.0
        %460 = vmatpush1.msra.mxu0 0.0
        %461 = vmatprep.subr.mxu0 0.0
        %462 = vmatpush1.msra.mxu0 0.0
        %463 = vmatprep.subr.mxu0 0.0
        %464 = vmatpush1.msra.mxu0 0.0
        %465 = vmatprep.subr.mxu0 0.0
        %466 = vmatpush1.msra.mxu0 0.0
        %467 = vmatprep.subr.mxu0 0.0
        %468 = vmatpush1.msra.mxu0 0.0
        %469 = vmatprep.subr.mxu0 0.0
        %470 = vmatpush1.msra.mxu0 0.0
        %471 = vmatprep.subr.mxu0 0.0
        %472 = vmatpush1.msra.mxu0 0.0
        %473 = vmatprep.subr.mxu0 0.0
        %474 = vmatpush1.msra.mxu0 0.0
        %475 = vmatprep.subr.mxu0 0.0
        %476 = vmatpush1.msra.mxu0 0.0
        %477 = vmatprep.subr.mxu0 0.0
        %478 = vmatpush1.msra.mxu0 0.0
        %479 = vmatprep.subr.mxu0 0.0
        %480 = vmatpush1.msra.mxu0 0.0
        %481 = vmatprep.subr.mxu0 0.0
        %482 = vmatpush1.msra.mxu0 0.0
        %483 = vmatprep.subr.mxu0 0.0
        %484 = vmatpush1.msra.mxu0 0.0
        %485 = vmatprep.subr.mxu0 0.0
        %486 = vmatpush1.msra.mxu0 0.0
        %487 = vmatprep.subr.mxu0 0.0
        %488 = vmatpush1.msra.mxu0 0.0
        %489 = vmatprep.subr.mxu0 0.0
        %490 = vmatpush1.msra.mxu0 0.0
        %491 = vmatprep.subr.mxu0 0.0
        %492 = vmatpush1.msra.mxu0 0.0
        %493 = vmatprep.subr.mxu0 0.0
        %494 = vmatpush1.msra.mxu0 0.0
        %495 = vmatprep.subr.mxu0 0.0
        %496 = vmatpush1.msra.mxu0 0.0
        %497 = vmatprep.subr.mxu0 0.0
        %498 = vmatpush1.msra.mxu0 0.0
        %499 = vmatprep.subr.mxu0 0.0
        %500 = vmatpush1.msra.mxu0 0.0
        %501 = vmatprep.subr.mxu0 0.0
        %502 = vmatpush1.msra.mxu0 0.0
        %503 = vmatprep.mubr.f32.mxu0 0.0
        %504 = vmatmul.mubr.f32.gmra.mrb[0].mxu0 %v428
        %v505 = vpop.f32.mrb[0].mxu0
        %v506 = vadd.f32 %v409, %v505
        %v507 = vpop.f32.mrb[0].mxu0
        %508 = vmatprep.mubr.f32.mxu0 0.0
        %509 = vmatmul.mubr.f32.gmra.mrb[0].mxu0 %v431
        %v510 = vpop.f32.mrb[0].mxu0
        %v511 = vadd.f32 %v414, %v510
        %v512 = vpop.f32.mrb[0].mxu0
        %513 = vmatprep.mubr.f32.mxu0 0.0
        %514 = vmatmul.mubr.f32.gmra.mrb[0].mxu0 %v434
        %v515 = vpop.f32.mrb[0].mxu0
        %v516 = vadd.f32 %v419, %v515
        %v517 = vpop.f32.mrb[0].mxu0
        %518 = vmatprep.mubr.f32.mxu0 0.0
        %519 = vmatmul.mubr.f32.gmra.mrb[0].mxu0 %v437
        %v520 = vpop.f32.mrb[0].mxu0
        %v521 = vadd.f32 %v424, %v520
        %v522 = vpop.f32.mrb[0].mxu0
        %523 = vdwg.mxu0
        %v524 = vmax.f32 %v506, 0.0
        %v525 = vmax.f32 %v511, 0.0
        %v526 = vmax.f32 %v516, 0.0
        %v527 = vmax.f32 %v521, 0.0
        %v528 = vld [vmem:[%s3] sm:$0xff]
        %v529 = vld [vmem:[%s3 + $0x8] sm:$0xff]
        %v530 = vld [vmem:[%s3 + $0x10] sm:$0xff]
        %v531 = vld [vmem:[%s3 + $0x18] sm:$0xff]
        %v532 = vld [vmem:[%s8 + $0x20] sm:$0xff]
        %v533 = vld [vmem:[%s8 + $0x28] sm:$0xff]
        %v534 = vld [vmem:[%s8 + $0x30] sm:$0xff]
        %v535 = vld [vmem:[%s8 + $0x38] sm:$0xff]
        %537 = vset.pattern.permute.xlu0 0
        %538 = vperm.xlu0 %537, %v532
        %v539 = vpop.permute.xlu0 %538
        %542 = vset.pattern.permute.xlu0 0
        %543 = vperm.xlu0 %542, %v533
        %v544 = vpop.permute.xlu0 %543
        %547 = vset.pattern.permute.xlu0 0
        %548 = vperm.xlu0 %547, %v534
        %v549 = vpop.permute.xlu0 %548
        %552 = vset.pattern.permute.xlu0 0
        %553 = vperm.xlu0 %552, %v535
        %v554 = vpop.permute.xlu0 %553
        %v557 = vsel %vm426, %v528, 0
        %v560 = vsel %vm426, %v529, 0
        %v563 = vsel %vm426, %v530, 0
        %v566 = vsel %vm426, %v531, 0
        %568 = vmatprep.subr.mxu0 0.0
        %569 = vmatpush1.msra.mxu0 %v524
        %570 = vmatprep.subr.mxu0 0.0
        %571 = vmatpush1.msra.mxu0 %v525
        %572 = vmatprep.subr.mxu0 0.0
        %573 = vmatpush1.msra.mxu0 %v526
        %574 = vmatprep.subr.mxu0 0.0
        %575 = vmatpush1.msra.mxu0 %v527
        %576 = vmatprep.subr.mxu0 0.0
        %577 = vmatpush1.msra.mxu0 0.0
        %578 = vmatprep.subr.mxu0 0.0
        %579 = vmatpush1.msra.mxu0 0.0
        %580 = vmatprep.subr.mxu0 0.0
        %581 = vmatpush1.msra.mxu0 0.0
        %582 = vmatprep.subr.mxu0 0.0
        %583 = vmatpush1.msra.mxu0 0.0
        %584 = vmatprep.subr.mxu0 0.0
        %585 = vmatpush1.msra.mxu0 0.0
        %586 = vmatprep.subr.mxu0 0.0
        %587 = vmatpush1.msra.mxu0 0.0
        %588 = vmatprep.subr.mxu0 0.0
        %589 = vmatpush1.msra.mxu0 0.0
        %590 = vmatprep.subr.mxu0 0.0
        %591 = vmatpush1.msra.mxu0 0.0
        %592 = vmatprep.subr.mxu0 0.0
        %593 = vmatpush1.msra.mxu0 0.0
        %594 = vmatprep.subr.mxu0 0.0
        %595 = vmatpush1.msra.mxu0 0.0
        %596 = vmatprep.subr.mxu0 0.0
        %597 = vmatpush1.msra.mxu0 0.0
        %598 = vmatprep.subr.mxu0 0.0
        %599 = vmatpush1.msra.mxu0 0.0
        %600 = vmatprep.subr.mxu0 0.0
        %601 = vmatpush1.msra.mxu0 0.0
        %602 = vmatprep.subr.mxu0 0.0
        %603 = vmatpush1.msra.mxu0 0.0
        %604 = vmatprep.subr.mxu0 0.0
        %605 = vmatpush1.msra.mxu0 0.0
        %606 = vmatprep.subr.mxu0 0.0
        %607 = vmatpush1.msra.mxu0 0.0
        %608 = vmatprep.subr.mxu0 0.0
        %609 = vmatpush1.msra.mxu0 0.0
        %610 = vmatprep.subr.mxu0 0.0
        %611 = vmatpush1.msra.mxu0 0.0
        %612 = vmatprep.subr.mxu0 0.0
        %613 = vmatpush1.msra.mxu0 0.0
        %614 = vmatprep.subr.mxu0 0.0
        %615 = vmatpush1.msra.mxu0 0.0
        %616 = vmatprep.subr.mxu0 0.0
        %617 = vmatpush1.msra.mxu0 0.0
        %618 = vmatprep.subr.mxu0 0.0
        %619 = vmatpush1.msra.mxu0 0.0
        %620 = vmatprep.subr.mxu0 0.0
        %621 = vmatpush1.msra.mxu0 0.0
        %622 = vmatprep.subr.mxu0 0.0
        %623 = vmatpush1.msra.mxu0 0.0
        %624 = vmatprep.subr.mxu0 0.0
        %625 = vmatpush1.msra.mxu0 0.0
        %626 = vmatprep.subr.mxu0 0.0
        %627 = vmatpush1.msra.mxu0 0.0
        %628 = vmatprep.subr.mxu0 0.0
        %629 = vmatpush1.msra.mxu0 0.0
        %630 = vmatprep.subr.mxu0 0.0
        %631 = vmatpush1.msra.mxu0 0.0
        %632 = vmatprep.mubr.f32.mxu0 0.0
        %633 = vmatmul.mubr.f32.gmra.mrb[0].mxu0 %v557
        %v634 = vpop.f32.mrb[0].mxu0
        %v635 = vadd.f32 %v539, %v634
        %v636 = vpop.f32.mrb[0].mxu0
        %637 = vmatprep.mubr.f32.mxu0 0.0
        %638 = vmatmul.mubr.f32.gmra.mrb[0].mxu0 %v560
        %v639 = vpop.f32.mrb[0].mxu0
        %v640 = vadd.f32 %v544, %v639
        %v641 = vpop.f32.mrb[0].mxu0
        %642 = vmatprep.mubr.f32.mxu0 0.0
        %643 = vmatmul.mubr.f32.gmra.mrb[0].mxu0 %v563
        %v644 = vpop.f32.mrb[0].mxu0
        %v645 = vadd.f32 %v549, %v644
        %v646 = vpop.f32.mrb[0].mxu0
        %647 = vmatprep.mubr.f32.mxu0 0.0
        %648 = vmatmul.mubr.f32.gmra.mrb[0].mxu0 %v566
        %v649 = vpop.f32.mrb[0].mxu0
        %v650 = vadd.f32 %v554, %v649
        %v651 = vpop.f32.mrb[0].mxu0
        %652 = vdwg.mxu0
        %v653 = vmax.f32 %v635, 0.0
        %v654 = vmax.f32 %v640, 0.0
        %v655 = vmax.f32 %v645, 0.0
        %v656 = vmax.f32 %v650, 0.0
        %v657 = vld [vmem:[%s4] sm:$0xff]
        %v658 = vld [vmem:[%s8 + $0x40] sm:$0xff]
        %660 = vset.pattern.permute.xlu0 0
        %661 = vperm.xlu0 %660, %v658
        %v662 = vpop.permute.xlu0 %661
        %v665 = vsel %vm426, %v657, 0
        %667 = vmatprep.subr.mxu0 0.0
        %668 = vmatpush1.msra.mxu0 %v653
        %669 = vmatprep.subr.mxu0 0.0
        %670 = vmatpush1.msra.mxu0 %v654
        %671 = vmatprep.subr.mxu0 0.0
        %672 = vmatpush1.msra.mxu0 %v655
        %673 = vmatprep.subr.mxu0 0.0
        %674 = vmatpush1.msra.mxu0 %v656
        %675 = vmatprep.subr.mxu0 0.0
        %676 = vmatpush1.msra.mxu0 0.0
        %677 = vmatprep.subr.mxu0 0.0
        %678 = vmatpush1.msra.mxu0 0.0
        %679 = vmatprep.subr.mxu0 0.0
        %680 = vmatpush1.msra.mxu0 0.0
        %681 = vmatprep.subr.mxu0 0.0
        %682 = vmatpush1.msra.mxu0 0.0
        %683 = vmatprep.subr.mxu0 0.0
        %684 = vmatpush1.msra.mxu0 0.0
        %685 = vmatprep.subr.mxu0 0.0
        %686 = vmatpush1.msra.mxu0 0.0
        %687 = vmatprep.subr.mxu0 0.0
        %688 = vmatpush1.msra.mxu0 0.0
        %689 = vmatprep.subr.mxu0 0.0
        %690 = vmatpush1.msra.mxu0 0.0
        %691 = vmatprep.subr.mxu0 0.0
        %692 = vmatpush1.msra.mxu0 0.0
        %693 = vmatprep.subr.mxu0 0.0
        %694 = vmatpush1.msra.mxu0 0.0
        %695 = vmatprep.subr.mxu0 0.0
        %696 = vmatpush1.msra.mxu0 0.0
        %697 = vmatprep.subr.mxu0 0.0
        %698 = vmatpush1.msra.mxu0 0.0
        %699 = vmatprep.subr.mxu0 0.0
        %700 = vmatpush1.msra.mxu0 0.0
        %701 = vmatprep.subr.mxu0 0.0
        %702 = vmatpush1.msra.mxu0 0.0
        %703 = vmatprep.subr.mxu0 0.0
        %704 = vmatpush1.msra.mxu0 0.0
        %705 = vmatprep.subr.mxu0 0.0
        %706 = vmatpush1.msra.mxu0 0.0
        %707 = vmatprep.subr.mxu0 0.0
        %708 = vmatpush1.msra.mxu0 0.0
        %709 = vmatprep.subr.mxu0 0.0
        %710 = vmatpush1.msra.mxu0 0.0
        %711 = vmatprep.subr.mxu0 0.0
        %712 = vmatpush1.msra.mxu0 0.0
        %713 = vmatprep.subr.mxu0 0.0
        %714 = vmatpush1.msra.mxu0 0.0
        %715 = vmatprep.subr.mxu0 0.0
        %716 = vmatpush1.msra.mxu0 0.0
        %717 = vmatprep.subr.mxu0 0.0
        %718 = vmatpush1.msra.mxu0 0.0
        %719 = vmatprep.subr.mxu0 0.0
        %720 = vmatpush1.msra.mxu0 0.0
        %721 = vmatprep.subr.mxu0 0.0
        %722 = vmatpush1.msra.mxu0 0.0
        %723 = vmatprep.subr.mxu0 0.0
        %724 = vmatpush1.msra.mxu0 0.0
        %725 = vmatprep.subr.mxu0 0.0
        %726 = vmatpush1.msra.mxu0 0.0
        %727 = vmatprep.subr.mxu0 0.0
        %728 = vmatpush1.msra.mxu0 0.0
        %729 = vmatprep.subr.mxu0 0.0
        %730 = vmatpush1.msra.mxu0 0.0
        %731 = vmatprep.mubr.f32.mxu0 0.0
        %732 = vmatmul.mubr.f32.gmra.mrb[0].mxu0 %v665
        %v733 = vpop.f32.mrb[0].mxu0
        %v734 = vadd.f32 %v662, %v733
        %v735 = vpop.f32.mrb[0].mxu0
        %736 = vdwg.mxu0
        %v737 = vld [vmem:[%s393] sm:$0xf]
        %v738 = vmul.f32 %v734, 0.5
        %v739 = vmul.f32 %v738, 1.442695
        %v740 = vpow.pop %v739
        %v742 = vrot.slane %v740, 4
        %v744 = vmul.f32 %v737, %v742
        %v745 = vadd.f32 %v734, %v744
        %v746 = vld [vmem:[%s5] sm:$0xff]
        %v747 = vld [vmem:[%s5 + $0x8] sm:$0xff]
        %v748 = vld [vmem:[%s5 + $0x10] sm:$0xff]
        %v749 = vld [vmem:[%s5 + $0x18] sm:$0xff]
        %v750 = vld [vmem:[%s8 + $0x48] sm:$0xff]
        %v751 = vld [vmem:[%s8 + $0x50] sm:$0xff]
        %v752 = vld [vmem:[%s8 + $0x58] sm:$0xff]
        %v753 = vld [vmem:[%s8 + $0x60] sm:$0xff]
        %755 = vset.pattern.permute.xlu0 0
        %756 = vperm.xlu0 %755, %v750
        %v757 = vpop.permute.xlu0 %756
        %760 = vset.pattern.permute.xlu0 0
        %761 = vperm.xlu0 %760, %v751
        %v762 = vpop.permute.xlu0 %761
        %765 = vset.pattern.permute.xlu0 0
        %766 = vperm.xlu0 %765, %v752
        %v767 = vpop.permute.xlu0 %766
        %770 = vset.pattern.permute.xlu0 0
        %771 = vperm.xlu0 %770, %v753
        %v772 = vpop.permute.xlu0 %771
        %vm774 = vcmask 31744
        %v776 = vsel %vm774, %v746, 0
        %v779 = vsel %vm774, %v747, 0
        %v782 = vsel %vm774, %v748, 0
        %v785 = vsel %vm774, %v749, 0
        %vm787 = vcmask 1043456
        %v789 = vsel %vm787, %v745, 0
        %791 = vmatprep.subr.mxu0 0.0
        %792 = vmatpush1.msra.mxu0 %v789
        %793 = vmatprep.subr.mxu0 0.0
        %794 = vmatpush1.msra.mxu0 0.0
        %795 = vmatprep.subr.mxu0 0.0
        %796 = vmatpush1.msra.mxu0 0.0
        %797 = vmatprep.subr.mxu0 0.0
        %798 = vmatpush1.msra.mxu0 0.0
        %799 = vmatprep.subr.mxu0 0.0
        %800 = vmatpush1.msra.mxu0 0.0
        %801 = vmatprep.subr.mxu0 0.0
        %802 = vmatpush1.msra.mxu0 0.0
        %803 = vmatprep.subr.mxu0 0.0
        %804 = vmatpush1.msra.mxu0 0.0
        %805 = vmatprep.subr.mxu0 0.0
        %806 = vmatpush1.msra.mxu0 0.0
        %807 = vmatprep.subr.mxu0 0.0
        %808 = vmatpush1.msra.mxu0 0.0
        %809 = vmatprep.subr.mxu0 0.0
        %810 = vmatpush1.msra.mxu0 0.0
        %811 = vmatprep.subr.mxu0 0.0
        %812 = vmatpush1.msra.mxu0 0.0
        %813 = vmatprep.subr.mxu0 0.0
        %814 = vmatpush1.msra.mxu0 0.0
        %815 = vmatprep.subr.mxu0 0.0
        %816 = vmatpush1.msra.mxu0 0.0
        %817 = vmatprep.subr.mxu0 0.0
        %818 = vmatpush1.msra.mxu0 0.0
        %819 = vmatprep.subr.mxu0 0.0
        %820 = vmatpush1.msra.mxu0 0.0
        %821 = vmatprep.subr.mxu0 0.0
        %822 = vmatpush1.msra.mxu0 0.0
        %823 = vmatprep.subr.mxu0 0.0
        %824 = vmatpush1.msra.mxu0 0.0
        %825 = vmatprep.subr.mxu0 0.0
        %826 = vmatpush1.msra.mxu0 0.0
        %827 = vmatprep.subr.mxu0 0.0
        %828 = vmatpush1.msra.mxu0 0.0
        %829 = vmatprep.subr.mxu0 0.0
        %830 = vmatpush1.msra.mxu0 0.0
        %831 = vmatprep.subr.mxu0 0.0
        %832 = vmatpush1.msra.mxu0 0.0
        %833 = vmatprep.subr.mxu0 0.0
        %834 = vmatpush1.msra.mxu0 0.0
        %835 = vmatprep.subr.mxu0 0.0
        %836 = vmatpush1.msra.mxu0 0.0
        %837 = vmatprep.subr.mxu0 0.0
        %838 = vmatpush1.msra.mxu0 0.0
        %839 = vmatprep.subr.mxu0 0.0
        %840 = vmatpush1.msra.mxu0 0.0
        %841 = vmatprep.subr.mxu0 0.0
        %842 = vmatpush1.msra.mxu0 0.0
        %843 = vmatprep.subr.mxu0 0.0
        %844 = vmatpush1.msra.mxu0 0.0
        %845 = vmatprep.subr.mxu0 0.0
        %846 = vmatpush1.msra.mxu0 0.0
        %847 = vmatprep.subr.mxu0 0.0
        %848 = vmatpush1.msra.mxu0 0.0
        %849 = vmatprep.subr.mxu0 0.0
        %850 = vmatpush1.msra.mxu0 0.0
        %851 = vmatprep.subr.mxu0 0.0
        %852 = vmatpush1.msra.mxu0 0.0
        %853 = vmatprep.subr.mxu0 0.0
        %854 = vmatpush1.msra.mxu0 0.0
        %855 = vmatprep.mubr.f32.mxu0 0.0
        %856 = vmatmul.mubr.f32.gmra.mrb[0].mxu0 %v776
        %v857 = vpop.f32.mrb[0].mxu0
        %v858 = vadd.f32 %v757, %v857
        %v859 = vpop.f32.mrb[0].mxu0
        %860 = vmatprep.mubr.f32.mxu0 0.0
        %861 = vmatmul.mubr.f32.gmra.mrb[0].mxu0 %v779
        %v862 = vpop.f32.mrb[0].mxu0
        %v863 = vadd.f32 %v762, %v862
        %v864 = vpop.f32.mrb[0].mxu0
        %865 = vmatprep.mubr.f32.mxu0 0.0
        %866 = vmatmul.mubr.f32.gmra.mrb[0].mxu0 %v782
        %v867 = vpop.f32.mrb[0].mxu0
        %v868 = vadd.f32 %v767, %v867
        %v869 = vpop.f32.mrb[0].mxu0
        %870 = vmatprep.mubr.f32.mxu0 0.0
        %871 = vmatmul.mubr.f32.gmra.mrb[0].mxu0 %v785
        %v872 = vpop.f32.mrb[0].mxu0
        %v873 = vadd.f32 %v772, %v872
        %v874 = vpop.f32.mrb[0].mxu0
        %875 = vdwg.mxu0
        %v876 = vmax.f32 %v858, 0.0
        %v877 = vmax.f32 %v863, 0.0
        %v878 = vmax.f32 %v868, 0.0
        %v879 = vmax.f32 %v873, 0.0
        %v880 = vld [vmem:[%s6] sm:$0xff]
        %v881 = vld [vmem:[%s6 + $0x8] sm:$0xff]
        %v882 = vld [vmem:[%s6 + $0x10] sm:$0xff]
        %v883 = vld [vmem:[%s6 + $0x18] sm:$0xff]
        %v884 = vld [vmem:[%s8 + $0x68] sm:$0xff]
        %v885 = vld [vmem:[%s8 + $0x70] sm:$0xff]
        %v886 = vld [vmem:[%s8 + $0x78] sm:$0xff]
        %v887 = vld [vmem:[%s8 + $0x80] sm:$0xff]
        %889 = vset.pattern.permute.xlu0 0
        %890 = vperm.xlu0 %889, %v884
        %v891 = vpop.permute.xlu0 %890
        %894 = vset.pattern.permute.xlu0 0
        %895 = vperm.xlu0 %894, %v885
        %v896 = vpop.permute.xlu0 %895
        %899 = vset.pattern.permute.xlu0 0
        %900 = vperm.xlu0 %899, %v886
        %v901 = vpop.permute.xlu0 %900
        %904 = vset.pattern.permute.xlu0 0
        %905 = vperm.xlu0 %904, %v887
        %v906 = vpop.permute.xlu0 %905
        %v909 = vsel %vm426, %v880, 0
        %v912 = vsel %vm426, %v881, 0
        %v915 = vsel %vm426, %v882, 0
        %v918 = vsel %vm426, %v883, 0
        %920 = vmatprep.subr.mxu0 0.0
        %921 = vmatpush1.msra.mxu0 %v876
        %922 = vmatprep.subr.mxu0 0.0
        %923 = vmatpush1.msra.mxu0 %v877
        %924 = vmatprep.subr.mxu0 0.0
        %925 = vmatpush1.msra.mxu0 %v878
        %926 = vmatprep.subr.mxu0 0.0
        %927 = vmatpush1.msra.mxu0 %v879
        %928 = vmatprep.subr.mxu0 0.0
        %929 = vmatpush1.msra.mxu0 0.0
        %930 = vmatprep.subr.mxu0 0.0
        %931 = vmatpush1.msra.mxu0 0.0
        %932 = vmatprep.subr.mxu0 0.0
        %933 = vmatpush1.msra.mxu0 0.0
        %934 = vmatprep.subr.mxu0 0.0
        %935 = vmatpush1.msra.mxu0 0.0
        %936 = vmatprep.subr.mxu0 0.0
        %937 = vmatpush1.msra.mxu0 0.0
        %938 = vmatprep.subr.mxu0 0.0
        %939 = vmatpush1.msra.mxu0 0.0
        %940 = vmatprep.subr.mxu0 0.0
        %941 = vmatpush1.msra.mxu0 0.0
        %942 = vmatprep.subr.mxu0 0.0
        %943 = vmatpush1.msra.mxu0 0.0
        %944 = vmatprep.subr.mxu0 0.0
        %945 = vmatpush1.msra.mxu0 0.0
        %946 = vmatprep.subr.mxu0 0.0
        %947 = vmatpush1.msra.mxu0 0.0
        %948 = vmatprep.subr.mxu0 0.0
        %949 = vmatpush1.msra.mxu0 0.0
        %950 = vmatprep.subr.mxu0 0.0
        %951 = vmatpush1.msra.mxu0 0.0
        %952 = vmatprep.subr.mxu0 0.0
        %953 = vmatpush1.msra.mxu0 0.0
        %954 = vmatprep.subr.mxu0 0.0
        %955 = vmatpush1.msra.mxu0 0.0
        %956 = vmatprep.subr.mxu0 0.0
        %957 = vmatpush1.msra.mxu0 0.0
        %958 = vmatprep.subr.mxu0 0.0
        %959 = vmatpush1.msra.mxu0 0.0
        %960 = vmatprep.subr.mxu0 0.0
        %961 = vmatpush1.msra.mxu0 0.0
        %962 = vmatprep.subr.mxu0 0.0
        %963 = vmatpush1.msra.mxu0 0.0
        %964 = vmatprep.subr.mxu0 0.0
        %965 = vmatpush1.msra.mxu0 0.0
        %966 = vmatprep.subr.mxu0 0.0
        %967 = vmatpush1.msra.mxu0 0.0
        %968 = vmatprep.subr.mxu0 0.0
        %969 = vmatpush1.msra.mxu0 0.0
        %970 = vmatprep.subr.mxu0 0.0
        %971 = vmatpush1.msra.mxu0 0.0
        %972 = vmatprep.subr.mxu0 0.0
        %973 = vmatpush1.msra.mxu0 0.0
        %974 = vmatprep.subr.mxu0 0.0
        %975 = vmatpush1.msra.mxu0 0.0
        %976 = vmatprep.subr.mxu0 0.0
        %977 = vmatpush1.msra.mxu0 0.0
        %978 = vmatprep.subr.mxu0 0.0
        %979 = vmatpush1.msra.mxu0 0.0
        %980 = vmatprep.subr.mxu0 0.0
        %981 = vmatpush1.msra.mxu0 0.0
        %982 = vmatprep.subr.mxu0 0.0
        %983 = vmatpush1.msra.mxu0 0.0
        %984 = vmatprep.mubr.f32.mxu0 0.0
        %985 = vmatmul.mubr.f32.gmra.mrb[0].mxu0 %v909
        %v986 = vpop.f32.mrb[0].mxu0
        %v987 = vadd.f32 %v891, %v986
        %v988 = vpop.f32.mrb[0].mxu0
        %989 = vmatprep.mubr.f32.mxu0 0.0
        %990 = vmatmul.mubr.f32.gmra.mrb[0].mxu0 %v912
        %v991 = vpop.f32.mrb[0].mxu0
        %v992 = vadd.f32 %v896, %v991
        %v993 = vpop.f32.mrb[0].mxu0
        %994 = vmatprep.mubr.f32.mxu0 0.0
        %995 = vmatmul.mubr.f32.gmra.mrb[0].mxu0 %v915
        %v996 = vpop.f32.mrb[0].mxu0
        %v997 = vadd.f32 %v901, %v996
        %v998 = vpop.f32.mrb[0].mxu0
        %999 = vmatprep.mubr.f32.mxu0 0.0
        %1000 = vmatmul.mubr.f32.gmra.mrb[0].mxu0 %v918
        %v1001 = vpop.f32.mrb[0].mxu0
        %v1002 = vadd.f32 %v906, %v1001
        %v1003 = vpop.f32.mrb[0].mxu0
        %1004 = vdwg.mxu0
        %v1005 = vmax.f32 %v987, 0.0
        %v1006 = vmax.f32 %v992, 0.0
        %v1007 = vmax.f32 %v997, 0.0
        %v1008 = vmax.f32 %v1002, 0.0
        %v1009 = vld [vmem:[%s7] sm:$0xff]
        %v1010 = vld [vmem:[%s7 + $0x8] sm:$0xff]
        %v1011 = vld [vmem:[%s7 + $0x10] sm:$0xff]
        %v1012 = vld [vmem:[%s8 + $0x88] sm:$0xff]
        %v1013 = vld [vmem:[%s8 + $0x90] sm:$0xff]
        %v1014 = vld [vmem:[%s8 + $0x98] sm:$0xff]
        %1016 = vset.pattern.permute.xlu0 0
        %1017 = vperm.xlu0 %1016, %v1012
        %v1018 = vpop.permute.xlu0 %1017
        %1021 = vset.pattern.permute.xlu0 0
        %1022 = vperm.xlu0 %1021, %v1013
        %v1023 = vpop.permute.xlu0 %1022
        %1026 = vset.pattern.permute.xlu0 0
        %1027 = vperm.xlu0 %1026, %v1014
        %v1028 = vpop.permute.xlu0 %1027
        %v1031 = vsel %vm426, %v1009, 0
        %v1034 = vsel %vm426, %v1010, 0
        %v1037 = vsel %vm426, %v1011, 0
        %1039 = vmatprep.subr.mxu0 0.0
        %1040 = vmatpush1.msra.mxu0 %v1005
        %1041 = vmatprep.subr.mxu0 0.0
        %1042 = vmatpush1.msra.mxu0 %v1006
        %1043 = vmatprep.subr.mxu0 0.0
        %1044 = vmatpush1.msra.mxu0 %v1007
        %1045 = vmatprep.subr.mxu0 0.0
        %1046 = vmatpush1.msra.mxu0 %v1008
        %1047 = vmatprep.subr.mxu0 0.0
        %1048 = vmatpush1.msra.mxu0 0.0
        %1049 = vmatprep.subr.mxu0 0.0
        %1050 = vmatpush1.msra.mxu0 0.0
        %1051 = vmatprep.subr.mxu0 0.0
        %1052 = vmatpush1.msra.mxu0 0.0
        %1053 = vmatprep.subr.mxu0 0.0
        %1054 = vmatpush1.msra.mxu0 0.0
        %1055 = vmatprep.subr.mxu0 0.0
        %1056 = vmatpush1.msra.mxu0 0.0
        %1057 = vmatprep.subr.mxu0 0.0
        %1058 = vmatpush1.msra.mxu0 0.0
        %1059 = vmatprep.subr.mxu0 0.0
        %1060 = vmatpush1.msra.mxu0 0.0
        %1061 = vmatprep.subr.mxu0 0.0
        %1062 = vmatpush1.msra.mxu0 0.0
        %1063 = vmatprep.subr.mxu0 0.0
        %1064 = vmatpush1.msra.mxu0 0.0
        %1065 = vmatprep.subr.mxu0 0.0
        %1066 = vmatpush1.msra.mxu0 0.0
        %1067 = vmatprep.subr.mxu0 0.0
        %1068 = vmatpush1.msra.mxu0 0.0
        %1069 = vmatprep.subr.mxu0 0.0
        %1070 = vmatpush1.msra.mxu0 0.0
        %1071 = vmatprep.subr.mxu0 0.0
        %1072 = vmatpush1.msra.mxu0 0.0
        %1073 = vmatprep.subr.mxu0 0.0
        %1074 = vmatpush1.msra.mxu0 0.0
        %1075 = vmatprep.subr.mxu0 0.0
        %1076 = vmatpush1.msra.mxu0 0.0
        %1077 = vmatprep.subr.mxu0 0.0
        %1078 = vmatpush1.msra.mxu0 0.0
        %1079 = vmatprep.subr.mxu0 0.0
        %1080 = vmatpush1.msra.mxu0 0.0
        %1081 = vmatprep.subr.mxu0 0.0
        %1082 = vmatpush1.msra.mxu0 0.0
        %1083 = vmatprep.subr.mxu0 0.0
        %1084 = vmatpush1.msra.mxu0 0.0
        %1085 = vmatprep.subr.mxu0 0.0
        %1086 = vmatpush1.msra.mxu0 0.0
        %1087 = vmatprep.subr.mxu0 0.0
        %1088 = vmatpush1.msra.mxu0 0.0
        %1089 = vmatprep.subr.mxu0 0.0
        %1090 = vmatpush1.msra.mxu0 0.0
        %1091 = vmatprep.subr.mxu0 0.0
        %1092 = vmatpush1.msra.mxu0 0.0
        %1093 = vmatprep.subr.mxu0 0.0
        %1094 = vmatpush1.msra.mxu0 0.0
        %1095 = vmatprep.subr.mxu0 0.0
        %1096 = vmatpush1.msra.mxu0 0.0
        %1097 = vmatprep.subr.mxu0 0.0
        %1098 = vmatpush1.msra.mxu0 0.0
        %1099 = vmatprep.subr.mxu0 0.0
        %1100 = vmatpush1.msra.mxu0 0.0
        %1101 = vmatprep.subr.mxu0 0.0
        %1102 = vmatpush1.msra.mxu0 0.0
        %1103 = vmatprep.mubr.f32.mxu0 0.0
        %1104 = vmatmul.mubr.f32.gmra.mrb[0].mxu0 %v1031
        %v1105 = vpop.f32.mrb[0].mxu0
        %v1106 = vadd.f32 %v1018, %v1105
        %v1107 = vpop.f32.mrb[0].mxu0
        %1108 = vmatprep.mubr.f32.mxu0 0.0
        %1109 = vmatmul.mubr.f32.gmra.mrb[0].mxu0 %v1034
        %v1110 = vpop.f32.mrb[0].mxu0
        %v1111 = vadd.f32 %v1023, %v1110
        %v1112 = vpop.f32.mrb[0].mxu0
        %1113 = vmatprep.mubr.f32.mxu0 0.0
        %1114 = vmatmul.mubr.f32.gmra.mrb[0].mxu0 %v1037
        %v1115 = vpop.f32.mrb[0].mxu0
        %v1116 = vadd.f32 %v1028, %v1115
        %v1117 = vpop.f32.mrb[0].mxu0
        %1118 = vdwg.mxu0
        %1119 = vst [vmem:[%s389] sm:$0xff] %v734
        %1120 = vst [vmem:[%s389 + $0x8] sm:$0xff] %v1106
        %1121 = vst [vmem:[%s389 + $0x10] sm:$0xff] %v1111
        %1122 = vst [vmem:[%s389 + $0x18] sm:$0xff] %v1116
        %s1123 = sand.u32 %s230, 1
        %s1124 = scalar_lea.sflag [#allocation4], %s1123
        %s1125 = sand.u32 %s230, 1
        %s1126 = smul.addr %s1125, 32
        %s1127 = scalar_lea.vmem [#allocation3], %s1126
        // Predicated region
        $region95: #{tpu_custom_call.1} parent=89 // pred_check
          %p1128 = pneg %p240
        $region96: #{tpu_custom_call.1} parent=89 // pred_check_branch
          %1130 = sbr.rel (%p1128) target = $region98
        $region97: #{tpu_custom_call.1} parent=89 // pred_region
          %s1132 = ssub.s32 512, 512
          %1133 = vsyncadd %s1124, %s1132
          %s1134 = smul.addr %s23, 128
          %s1135 = scalar_lea.hbm %s9, %s1134
          %s1136 = sshll.u32 %s1127, 4
          %s1137 = int_to_ptr.vmem [resolvable:$true] %s1136
          %1142 = dma.vmem_to_hbm [thread:$0]  %s1137, 512, %s1135, %s1124, 128, 256, 8
        $region98: #{tpu_custom_call.1} parent=89 // pred_fallthru
          _
      $region90: #{tpu_custom_call.1} parent=5 // pred_fallthru
        _
      %p1143 = scmp.le.s32.totalorder 2, %s18
      // Predicated region
      $region99: #{tpu_custom_call.1} parent=5 // pred_check
        %p1144 = pneg %p1143
      $region100: #{tpu_custom_call.1} parent=5 // pred_check_branch
        %1146 = sbr.rel (%p1144) target = $region102
      $region101: #{tpu_custom_call.1} parent=5 // pred_region
        %s1147 = ssub.s32 %s18, 2
        // Predicated region
        $region103: #{tpu_custom_call.1} parent=101 // pred_check
          %p1148 = pneg %p246
        $region104: #{tpu_custom_call.1} parent=101 // pred_check_branch
          %1150 = sbr.rel (%p1148) target = $region106
        $region105: #{tpu_custom_call.1} parent=101 // pred_region
          %s1151 = sand.u32 %s231, 1
          %s1152 = scalar_lea.sflag [#allocation4], %s1151
          %s1153 = sand.u32 %s231, 1
          %s1154 = smul.addr %s1153, 32
          %s1155 = scalar_lea.vmem [#allocation3], %s1154
          %1156 = dma.done %s1152, 512
        $region106: #{tpu_custom_call.1} parent=101 // pred_fallthru
          _
      $region102: #{tpu_custom_call.1} parent=5 // pred_fallthru
        _
    $region6: #{tpu_custom_call.1} parent=1 // loop_footer
      %s22 = sadd.s32 1, %s18
    $region7: #{tpu_custom_call.1} parent=1 // loop_footer_branch
      %17 = sbr.rel target = $region3
    $region8: #{tpu_custom_call.1} parent=1 // loop_exit
      _
    %1157 = vsyncpa [#allocation4], 1
    %s1158 = scalar_lea.sflag [#allocation4], 1
    %1159 = vsyncpa %s1158, 1

</llo_original>
